<compile_context>
chip_gen: v5e
topology: v5e:2x2
jax: 0.10.0
libtpu: 0.0.40
codegen_flags: <defaults>
</compile_context>

<pallas_src>
import jax
import jax.numpy as jnp
from jax.experimental import pallas as pl
from jax.experimental.pallas import tpu as pltpu


_VMEM_TILE_BUDGET = 12 * 1024 * 1024   # bytes for double-buffered x/out tiles
_VMEM_LIMIT_BYTES = 32 * 1024 * 1024   # explicit scoped-VMEM request (ok on v5e/v6e/v7x)
_TARGET_ROW_TILE = 1024


def _round_up(n, m):
    return ((n + m - 1) // m) * m


def _choose_row_tile(n_rows, in_dim, out_dim, itemsize):
    """Row tile TR (multiple of 8, MXU-friendly when large) fitting the VMEM budget."""
    per_row = 2 * (in_dim + out_dim) * itemsize       # double-buffered x + out tile
    max_rows = max(8, _VMEM_TILE_BUDGET // max(per_row, 1))
    tr = min(_TARGET_ROW_TILE, max_rows)
    tr = max(8, (tr // 8) * 8)                        # sublane granule
    if tr >= 256:                                     # MXU-friendly multiple
        tr = (tr // 256) * 256
    tr = min(tr, _round_up(n_rows, 8))                # don't over-tile tiny inputs
    return tr


# ---------------------------------------------------------------------------
# Kernel 1: shared-x, lane-dense packed matmul.
#   x: (TR, J) @ W_packed: (J, E*K) + b_packed: (1, E*K) -> (TR, E*K)
# ---------------------------------------------------------------------------
def _packed_matmul_kernel(x_ref, w_ref, b_ref, o_ref):
    acc = jnp.dot(x_ref[...], w_ref[...], preferred_element_type=jnp.float32)
    o_ref[...] = (acc + b_ref[...].astype(jnp.float32)).astype(o_ref.dtype)


def _shared_x_matmul(x2, w_packed, b_packed, out_dtype):
    """x2: (R, J); w_packed: (J, N); b_packed: (1, N). Returns (R, N)."""
    R, J = x2.shape
    N = w_packed.shape[1]
    itemsize = max(jnp.dtype(out_dtype).itemsize, x2.dtype.itemsize)
    tr = _choose_row_tile(R, J, N, itemsize)
    r_pad = _round_up(R, tr)
    if r_pad != R:
        x2 = jnp.pad(x2, ((0, r_pad - R), (0, 0)))
    n_r = r_pad // tr

    cost = pl.CostEstimate(
        flops=2 * r_pad * J * N,
        transcendentals=0,
        bytes_accessed=(r_pad * J + J * N + N + r_pad * N) * itemsize,
    )

    out = pl.pallas_call(
        _packed_matmul_kernel,
        out_shape=jax.ShapeDtypeStruct((r_pad, N), out_dtype),
        grid=(n_r,),
        in_specs=[
            pl.BlockSpec((tr, J), lambda r: (r, 0)),
            pl.BlockSpec((J, N), lambda r: (0, 0)),   # resident: block idx constant
            pl.BlockSpec((1, N), lambda r: (0, 0)),
        ],
        out_specs=pl.BlockSpec((tr, N), lambda r: (r, 0)),
        compiler_params=pltpu.CompilerParams(
            dimension_semantics=("parallel",),
            vmem_limit_bytes=_VMEM_LIMIT_BYTES),
        cost_estimate=cost,
    )(x2, w_packed, b_packed)

    if r_pad != R:
        out = out[:R]
    return out


# ---------------------------------------------------------------------------
# Kernel 2: per-ensemble matmul (x has a leading E axis).
#   x: (1, TR, J) @ w: (1, J, K) + b: (1, 1, K) -> (1, TR, K)
# ---------------------------------------------------------------------------
def _ensemble_matmul_kernel(x_ref, w_ref, b_ref, o_ref):
    acc = jnp.dot(x_ref[0], w_ref[0], preferred_element_type=jnp.float32)
    o_ref[0, :, :] = (acc + b_ref[0].astype(jnp.float32)).astype(o_ref.dtype)


def _per_ensemble_matmul(x3, weight, bias, out_dtype):
    """x3: (E, R, J); weight: (E, J, K); bias: (E, 1, K). Returns (E, R, K)."""
    E, J, K = weight.shape
    Ex, R, Jx = x3.shape
    assert Ex == E and Jx == J
    itemsize = max(jnp.dtype(out_dtype).itemsize, x3.dtype.itemsize)
    tr = _choose_row_tile(R, J, K, itemsize)
    r_pad = _round_up(R, tr)
    if r_pad != R:
        x3 = jnp.pad(x3, ((0, 0), (0, r_pad - R), (0, 0)))
    n_r = r_pad // tr

    cost = pl.CostEstimate(
        flops=2 * E * r_pad * J * K,
        transcendentals=0,
        bytes_accessed=E * (r_pad * J + J * K + K + r_pad * K) * itemsize,
    )

    out = pl.pallas_call(
        _ensemble_matmul_kernel,
        out_shape=jax.ShapeDtypeStruct((E, r_pad, K), out_dtype),
        # E is the OUTER grid axis, row tiles inner: weight/bias block index
        # depends only on e, so Pallas skips their re-DMA across the R sweep.
        grid=(E, n_r),
        in_specs=[
            pl.BlockSpec((1, tr, J), lambda e, r: (e, r, 0)),
            pl.BlockSpec((1, J, K), lambda e, r: (e, 0, 0)),
            pl.BlockSpec((1, 1, K), lambda e, r: (e, 0, 0)),
        ],
        out_specs=pl.BlockSpec((1, tr, K), lambda e, r: (e, r, 0)),
        compiler_params=pltpu.CompilerParams(
            dimension_semantics=("parallel", "parallel"),
            vmem_limit_bytes=_VMEM_LIMIT_BYTES),
        cost_estimate=cost,
    )(x3, weight, bias)

    if r_pad != R:
        out = out[:, :R]
    return out


# ---------------------------------------------------------------------------
# Forward wrapper matching EnsembleLinear.forward exactly.
# ---------------------------------------------------------------------------
def ensemble_linear_forward(x, weight, bias):
    E, J, K = weight.shape
    out_dtype = jnp.result_type(x.dtype, weight.dtype)

    if x.ndim == 2:
        # 'ij,bjk->bik' + bias -> (E, M, K): lane-dense packed matmul.
        M = x.shape[0]
        w_packed = jnp.transpose(weight, (1, 0, 2)).reshape(J, E * K)
        b_packed = bias.reshape(1, E * K)
        out = _shared_x_matmul(x, w_packed, b_packed, out_dtype)     # (M, E*K)
        return jnp.transpose(out.reshape(M, E, K), (1, 0, 2))        # (E, M, K)

    elif x.ndim == 3:
        if x.shape[0] == E:
            # 'bij,bjk->bik' + bias -> (E, M, K)
            return _per_ensemble_matmul(x, weight, bias, out_dtype)
        else:
            # 'cij,bjk->bcik' + bias[:, None] -> (E, C, M, K): shared-x packed.
            C, M, _ = x.shape
            w_packed = jnp.transpose(weight, (1, 0, 2)).reshape(J, E * K)
            b_packed = bias.reshape(1, E * K)
            out = _shared_x_matmul(x.reshape(C * M, J), w_packed, b_packed,
                                   out_dtype)                        # (C*M, E*K)
            out = out.reshape(C, M, E, K)
            return jnp.transpose(out, (2, 0, 1, 3))                  # (E, C, M, K)

    else:
        # 'bcij,bjk->bcik' + bias[:, None] -> (E, C, M, K)
        assert x.ndim == 4, f"unsupported input rank {x.ndim}"
        B, C, M, _ = x.shape
        assert B == E, (
            f"4D input leading dim {B} must equal num_ensemble {E} "
            "(torch einsum 'bcij,bjk->bcik' requires it)")
        out = _per_ensemble_matmul(x.reshape(B, C * M, J), weight, bias,
                                   out_dtype)                        # (E, C*M, K)
        return out.reshape(B, C, M, K)


def init_ensemble_linear(key, input_dim, output_dim, num_ensemble):
    """Parameter init mirroring the torch module:
    weight ~ trunc_normal(std=1/(2*sqrt(input_dim))), bias = 0."""
    std = 1.0 / (2.0 * input_dim ** 0.5)
    w = jax.random.truncated_normal(
        key, -2.0, 2.0, (num_ensemble, input_dim, output_dim),
        dtype=jnp.float32) * std
    b = jnp.zeros((num_ensemble, 1, output_dim), dtype=jnp.float32)
    return w, b


def _reference(x, weight, bias):
    E = weight.shape[0]
    if x.ndim == 2:
        out = jnp.einsum('ij,bjk->bik', x, weight)
    elif x.ndim == 3:
        if x.shape[0] == E:
            out = jnp.einsum('bij,bjk->bik', x, weight)
        else:
            out = jnp.einsum('cij,bjk->bcik', x, weight)
    else:
        out = jnp.einsum('bcij,bjk->bcik', x, weight)
    if out.ndim == 3:
        return out + bias
    return out + bias[:, None]


if __name__ == "__main__":
    key = jax.random.PRNGKey(0)
    k_w, k_x2, k_x3, k_x3c, k_x4 = jax.random.split(key, 5)

    num_ensemble = 4
    input_dim = 32
    output_dim = 16

    weight, bias = init_ensemble_linear(k_w, input_dim, output_dim, num_ensemble)

    # 2D input: (batch=8, input_dim)
    x2 = jax.random.normal(k_x2, (8, input_dim), dtype=jnp.float32)
    # 3D input, leading dim == num_ensemble: (E, batch=8, input_dim)
    x3 = jax.random.normal(k_x3, (num_ensemble, 8, input_dim), dtype=jnp.float32)
    # 3D input, leading dim != num_ensemble: (C=2, batch=8, input_dim)
    x3c = jax.random.normal(k_x3c, (2, 8, input_dim), dtype=jnp.float32)
    # 4D input: (E, C=2, batch=8, input_dim)
    x4 = jax.random.normal(k_x4, (num_ensemble, 2, 8, input_dim), dtype=jnp.float32)

    ok = True
    for x in (x2, x3, x3c, x4):
        out = ensemble_linear_forward(x, weight, bias)
        jax.block_until_ready(out)
        ref = _reference(x, weight, bias)
        assert out.shape == ref.shape, (out.shape, ref.shape)
        ok = ok and bool(jnp.allclose(out, ref, atol=1e-5, rtol=1e-5))

    if ok:
        print("KERNEL_OK")
    else:
        print("KERNEL_MISMATCH")
</pallas_src>

<mosaic_0001>
module attributes {stable_mosaic.version = 11 : i64} {
  func.func @_packed_matmul_kernel(%arg0: i32, %arg1: memref<8x32xf32, #tpu.memory_space<vmem>>, %arg2: memref<32x64xf32, #tpu.memory_space<vmem>>, %arg3: memref<1x64xf32, #tpu.memory_space<vmem>>, %arg4: memref<8x64xf32, #tpu.memory_space<vmem>>) attributes {dimension_semantics = [#tpu.dimension_semantics<parallel>], iteration_bounds = array<i64: 1>, scalar_prefetch = 0 : i64, scratch_operands = 0 : i64, tpu.core_type = #tpu.core_type<tc>, window_params = [{transform_indices = @transform_0, window_bounds = array<i64: 8, 32>}, {pipeline_mode = #tpu.pipeline_mode<synchronous>, transform_indices = @transform_1, window_bounds = array<i64: 32, 64>}, {pipeline_mode = #tpu.pipeline_mode<synchronous>, transform_indices = @transform_2, window_bounds = array<i64: 1, 64>}, {transform_indices = @transform_3, window_bounds = array<i64: 8, 64>}]} {
    %c0 = arith.constant 0 : index
    %c0_0 = arith.constant 0 : index
    %0 = vector.load %arg1[%c0, %c0_0] : memref<8x32xf32, #tpu.memory_space<vmem>>, vector<8x32xf32>
    %c0_1 = arith.constant 0 : index
    %c0_2 = arith.constant 0 : index
    %1 = vector.load %arg2[%c0_1, %c0_2] : memref<32x64xf32, #tpu.memory_space<vmem>>, vector<32x64xf32>
    %cst = arith.constant dense<0.000000e+00> : vector<8x64xf32>
    %2 = tpu.matmul %0, %1, %cst {dimension_numbers = #tpu.dot_dimension_numbers<[1], [0], [0], [1], [0, 0, 1, 1], [], []>} : vector<8x32xf32>, vector<32x64xf32>, vector<8x64xf32> -> vector<8x64xf32>
    %c0_3 = arith.constant 0 : index
    %c0_4 = arith.constant 0 : index
    %3 = vector.load %arg3[%c0_3, %c0_4] : memref<1x64xf32, #tpu.memory_space<vmem>>, vector<1x64xf32>
    %4 = vector.broadcast %3 : vector<1x64xf32> to vector<8x64xf32>
    %5 = arith.addf %2, %4 : vector<8x64xf32>
    %c0_5 = arith.constant 0 : index
    %c0_6 = arith.constant 0 : index
    %6 = vector.load %arg4[%c0_5, %c0_6] : memref<8x64xf32, #tpu.memory_space<vmem>>, vector<8x64xf32>
    tpu.vector_store %arg4[%c0_5, %c0_6], %5 {strides = array<i32>} : memref<8x64xf32, #tpu.memory_space<vmem>>, vector<8x64xf32>,
    return
  }
  func.func @transform_0(%arg0: i32) -> (i32, i32) {
    %c0_i32 = arith.constant 0 : i32
    %c0_i32_0 = arith.constant 0 : i32
    return %arg0, %c0_i32 : i32, i32
  }
  func.func @transform_1(%arg0: i32) -> (i32, i32) {
    %c0_i32 = arith.constant 0 : i32
    %c0_i32_0 = arith.constant 0 : i32
    %c0_i32_1 = arith.constant 0 : i32
    return %c0_i32, %c0_i32_0 : i32, i32
  }
  func.func @transform_2(%arg0: i32) -> (i32, i32) {
    %c0_i32 = arith.constant 0 : i32
    %c0_i32_0 = arith.constant 0 : i32
    %c0_i32_1 = arith.constant 0 : i32
    return %c0_i32, %c0_i32_0 : i32, i32
  }
  func.func @transform_3(%arg0: i32) -> (i32, i32) {
    %c0_i32 = arith.constant 0 : i32
    %c0_i32_0 = arith.constant 0 : i32
    return %arg0, %c0_i32 : i32, i32
  }
}

</mosaic_0001>

<llo_original>
// kernel: tpu_custom_call.1
$region0: #{tpu_custom_call.1}
  #allocation0 [shape = 'u32[]', space=smem, size = 0x4, offset = 0x4, fixed_abs, tag = 'smem constant byte address 0x4 - core index']
  #allocation1 [shape = 'u32[72,128]{1,0:T(1,128)}', space=vmem, size = 0x9000, scoped, tag = 'internal scratch']
  %s0 = inlined_call_operand.hbm [shape: f32[8,32], index: 0, kind: input, shape index: {}]
  %s1 = inlined_call_operand.hbm [shape: f32[32,64], index: 1, kind: input, shape index: {}]
  %s2 = inlined_call_operand.vmem [shape: f32[1,64], index: 2, kind: input, shape index: {}]
  %s3 = inlined_call_operand.hbm [shape: f32[8,64], index: 3, kind: output, shape index: {}]
  %s4 = sld [smem:[#allocation0]]
  $region30: #{tpu_custom_call.1} parent=0
    _
  %s6 = ssub.s32 1, %s4
  %s7 = scalar_select 0, %s6, %s4
  $region1: #{tpu_custom_call.1} parent=0
    #allocation2 [shape = 'u8[4096]{0}', space=vmem, size = 0x1000, scoped, tag = 'input window, operand 0, single buffered']
    #allocation3 [shape = 's32[1]{0}', space=sflag, size = 0x4, scoped, tag = 'scoped memory for tpu_custom_call.1']
    #allocation4 [shape = 's32[1]{0}', space=sflag, size = 0x4, scoped, tag = 'scoped memory for tpu_custom_call.1']
    #allocation5 [shape = 'u8[16384]{0}', space=vmem, size = 0x4000, scoped, tag = 'input window, operand 1, single buffered']
    #allocation6 [shape = 's32[1]{0}', space=sflag, size = 0x4, scoped, tag = 'scoped memory for tpu_custom_call.1']
    #allocation7 [shape = 'u8[4096]{0}', space=vmem, size = 0x1000, scoped, tag = 'output window, operand 0, single buffered']
    %8 = vsyncpa [#allocation3], 0
    %9 = vsyncpa [#allocation6], 0
    %10 = vsyncpa [#allocation4], 0
    // Predicated region
    $region2: #{tpu_custom_call.1} parent=1 // pred_check
      _
    $region3: #{tpu_custom_call.1} parent=1 // pred_check_branch
      %12 = sbr.rel (0) target = $region5
    $region4: #{tpu_custom_call.1} parent=1 // pred_region
      %14 = vsyncadd [#allocation3], 0
      %s16 = sshll.u32 %s0, 4
      %s17 = int_to_ptr.hbm [resolvable:$true] %s16
      %s18 = sshll.u32 [#allocation2], 4
      %s19 = int_to_ptr.vmem [resolvable:$true] %s18
      %21 = dma.hbm_to_vmem [thread:$0]  %s17, 128, %s19, [#allocation3]
    $region5: #{tpu_custom_call.1} parent=1 // pred_fallthru
      _
    // Predicated region
    $region6: #{tpu_custom_call.1} parent=1 // pred_check
      _
    $region7: #{tpu_custom_call.1} parent=1 // pred_check_branch
      %23 = sbr.rel (0) target = $region9
    $region8: #{tpu_custom_call.1} parent=1 // pred_region
      %25 = vsyncadd [#allocation6], 0
      %s26 = sshll.u32 %s1, 4
      %s27 = int_to_ptr.hbm [resolvable:$true] %s26
      %s28 = sshll.u32 [#allocation5], 4
      %s29 = int_to_ptr.vmem [resolvable:$true] %s28
      %34 = dma.hbm_to_vmem [thread:$0]  %s27, 512, %s29, [#allocation6], 128, 128, 8
    $region9: #{tpu_custom_call.1} parent=1 // pred_fallthru
      _
    // Predicated region
    $region10: #{tpu_custom_call.1} parent=1 // pred_check
      _
    $region11: #{tpu_custom_call.1} parent=1 // pred_check_branch
      %36 = sbr.rel (0) target = $region13
    $region12: #{tpu_custom_call.1} parent=1 // pred_region
      _
    $region13: #{tpu_custom_call.1} parent=1 // pred_fallthru
      _
    // Predicated region
    $region14: #{tpu_custom_call.1} parent=1 // pred_check
      _
    $region15: #{tpu_custom_call.1} parent=1 // pred_check_branch
      %38 = sbr.rel (0) target = $region17
    $region16: #{tpu_custom_call.1} parent=1 // pred_region
      %40 = dma.done [#allocation3], 128
    $region17: #{tpu_custom_call.1} parent=1 // pred_fallthru
      _
    // Predicated region
    $region18: #{tpu_custom_call.1} parent=1 // pred_check
      _
    $region19: #{tpu_custom_call.1} parent=1 // pred_check_branch
      %42 = sbr.rel (0) target = $region21
    $region20: #{tpu_custom_call.1} parent=1 // pred_region
      %44 = dma.done [#allocation6], 512
    $region21: #{tpu_custom_call.1} parent=1 // pred_fallthru
      _
    %v45 = vld [vmem:[#allocation2] sm:$0xff]
    %v46 = vld [vmem:[#allocation5] sm:$0xff]
    %v47 = vld [vmem:[#allocation5 + $0x8] sm:$0xff]
    %v48 = vld [vmem:[#allocation5 + $0x10] sm:$0xff]
    %v49 = vld [vmem:[#allocation5 + $0x18] sm:$0xff]
    %v50 = vld [vmem:[%s2] sm:$0x1]
    %v52 = vperm.slane %v50, 0
    %vm54 = vcmask 261120
    %v56 = vsel %vm54, %v45, 0
    %58 = vmatpush.msra.mxu0 0.0
    %59 = vmatpush.msra.mxu0 0.0
    %60 = vmatpush.msra.mxu0 0.0
    %61 = vmatpush.msra.mxu0 0.0
    %62 = vmatpush.msra.mxu0 0.0
    %63 = vmatpush.msra.mxu0 0.0
    %64 = vmatpush.msra.mxu0 0.0
    %65 = vmatpush.msra.mxu0 0.0
    %66 = vmatpush.msra.mxu0 0.0
    %67 = vmatpush.msra.mxu0 0.0
    %68 = vmatpush.msra.mxu0 0.0
    %69 = vmatpush.msra.mxu0 0.0
    %70 = vmatpush.msra.mxu0 %v49
    %71 = vmatpush.msra.mxu0 %v48
    %72 = vmatpush.msra.mxu0 %v47
    %73 = vmatpush.msra.mxu0 %v46
    %74 = vmatmul.f32.gmra.mxu0 %v56
    %v75 = vpop.f32.mrf.mxu0
    %v76 = vadd.f32 %v52, %v75
    %77 = vdwg.mxu0
    %vm78 = vcmask 523264
    %79 = vst.msk [vmem:[#allocation7] sm:$0xff] %vm78, %v76
    // Predicated region
    $region22: #{tpu_custom_call.1} parent=1 // pred_check
      _
    $region23: #{tpu_custom_call.1} parent=1 // pred_check_branch
      %81 = sbr.rel (0) target = $region25
    $region24: #{tpu_custom_call.1} parent=1 // pred_region
      %83 = vsyncadd [#allocation4], 0
      %s85 = sshll.u32 [#allocation7], 4
      %s86 = int_to_ptr.vmem [resolvable:$true] %s85
      %s87 = sshll.u32 %s3, 4
      %s88 = int_to_ptr.hbm [resolvable:$true] %s87
      %90 = dma.vmem_to_hbm [thread:$0]  %s86, 128, %s88, [#allocation4]
    $region25: #{tpu_custom_call.1} parent=1 // pred_fallthru
      _
    // Predicated region
    $region26: #{tpu_custom_call.1} parent=1 // pred_check
      _
    $region27: #{tpu_custom_call.1} parent=1 // pred_check_branch
      %92 = sbr.rel (0) target = $region29
    $region28: #{tpu_custom_call.1} parent=1 // pred_region
      %94 = dma.done [#allocation4], 128
    $region29: #{tpu_custom_call.1} parent=1 // pred_fallthru
      _
    %95 = vsyncpa [#allocation3], 1
    %96 = vsyncpa [#allocation6], 1
    %97 = vsyncpa [#allocation4], 1

</llo_original>
